<compile_context>
chip_gen: v7x
topology: tpu7x:2x2x1
jax: 0.10.0
libtpu: 0.0.40
codegen_flags: <defaults>
</compile_context>

<pallas_src>
import functools

import jax
import jax.numpy as jnp
from jax import lax
from jax.experimental import pallas as pl
from jax.experimental.pallas import tpu as pltpu

BN_EPS = 1e-5
_INV_SQRT2 = 0.7071067811865476
_NEG_INF = float("-inf")


# --------------------------- chip-aware sizing -------------------------------

def _vmem_capacity_bytes():
    try:
        return int(pltpu.get_tpu_info().vmem_capacity_bytes)
    except Exception:
        pass
    try:
        kind = jax.devices()[0].device_kind.lower()
    except Exception:
        kind = ""
    if "v5" in kind or "v6" in kind:
        return 128 * 1024 * 1024
    return 64 * 1024 * 1024          # conservative default (v7x per-core VMEM)


_VMEM_CAP = _vmem_capacity_bytes()
if _VMEM_CAP <= 64 * 1024 * 1024:    # v7x: 64 MiB / TensorCore, 2 TCs per chip
    _TN_CAP = 256
    _VMEM_LIMIT = 48 * 1024 * 1024
    _NUM_TC = 2
else:                                # v5e / v6e: 128 MiB VMEM, 1 TC per chip
    _TN_CAP = 512
    _VMEM_LIMIT = 100 * 1024 * 1024
    _NUM_TC = 1


def _round_up(v, m):
    return -(-v // m) * m


def _pick_tn(d2p, *, cap, prefer_split):
    cands = [t for t in (512, 256, 128) if t <= cap and d2p % t == 0]
    if prefer_split and d2p >= 256:
        split = [t for t in cands if t <= d2p // 2]
        if split:
            return split[0]          # keep >= 2 feature tiles so both TCs work
    return cands[0] if cands else 128


# ------------------------------ math helpers ---------------------------------

def _erf(x):
    # Abramowitz & Stegun 7.1.26 (|error| <= 1.5e-7); only exp/mul/add/where,
    # so it lowers cleanly on v5e/v6e/v7x.
    a1, a2, a3, a4, a5 = (0.254829592, -0.284496736, 1.421413741,
                          -1.453152027, 1.061405429)
    p = 0.3275911
    ax = jnp.where(x >= 0.0, x, -x)
    t = 1.0 / (1.0 + p * ax)
    poly = ((((a5 * t + a4) * t + a3) * t + a2) * t + a1) * t
    y = 1.0 - poly * jnp.exp(-(ax * ax))
    return jnp.where(x >= 0.0, y, -y)


def _apply_activation(h, activation, valid_cols=None):
    if activation is None:
        return h
    if activation == "gelu":                       # exact-erf GELU (torch default)
        return 0.5 * h * (1.0 + _erf(h * _INV_SQRT2))
    if activation == "relu":
        return jnp.maximum(h, 0.0)
    if activation == "tanh":
        return jnp.tanh(h)
    if activation in ("sigmodi", "sigmoid"):       # module's dict key is 'sigmodi'
        return 1.0 / (1.0 + jnp.exp(-h))
    if activation == "swish":
        return h / (1.0 + jnp.exp(-h))
    if activation == "elu":
        return jnp.where(h > 0.0, h, jnp.exp(h) - 1.0)
    if activation == "softmax":
        # Mask padded feature columns so they contribute exp(-inf) = 0.
        if valid_cols is not None and valid_cols < h.shape[-1]:
            col = lax.broadcasted_iota(jnp.int32, h.shape, h.ndim - 1)
            h = jnp.where(col < valid_cols, h, _NEG_INF)
        m = jnp.max(h, axis=-1, keepdims=True)
        e = jnp.exp(h - m)
        return e / jnp.sum(e, axis=-1, keepdims=True)
    raise ValueError(f"unsupported activation: {activation}")


# --------------------------------- kernels ------------------------------------

def _fused_encoder_kernel(*refs, layer_meta, norm, matmul_dtype):
    """Entire encoder chain, everything resident in VMEM (single grid point)."""
    o_ref = refs[-1]
    p_refs = refs[1:-1]
    h = refs[0][...].astype(jnp.float32)
    i = 0
    for activation, dout in layer_meta:
        w = p_refs[i][...]
        i += 1
        lhs = h.astype(matmul_dtype) if matmul_dtype is not None else h
        z = jnp.dot(lhs, w, preferred_element_type=jnp.float32)
        if norm:
            gamma = p_refs[i][...]
            beta = p_refs[i + 1][...]
            i += 2
            # Two-pass (centered) batch statistics: cheap when resident, and it
            # avoids the E[h^2]-mean^2 cancellation issue.
            mean = jnp.mean(z, axis=0, keepdims=True)
            c = z - mean
            var = jnp.mean(c * c, axis=0, keepdims=True)
            z = c * (gamma * lax.rsqrt(var + BN_EPS)) + beta
        else:
            z = z + p_refs[i][...]
            i += 1
        h = _apply_activation(z, activation, valid_cols=dout)
    # Dropout(p=0.0) is the identity and is not materialized.
    o_ref[...] = h.astype(o_ref.dtype)


def _layer_bias_kernel(x_ref, w_ref, b_ref, o_ref, *, activation, valid_cols,
                       matmul_dtype):
    # Linear (+ bias) (+ activation); x fully resident, features tiled.
    lhs = x_ref[...]
    if matmul_dtype is not None:
        lhs = lhs.astype(matmul_dtype)
    h = jnp.dot(lhs, w_ref[...], preferred_element_type=jnp.float32) + b_ref[...]
    o_ref[...] = _apply_activation(h, activation, valid_cols=valid_cols).astype(o_ref.dtype)


def _layer_bn_kernel(x_ref, w_ref, g_ref, b_ref, o_ref, *, activation, valid_cols,
                     matmul_dtype):
    # Linear -> BatchNorm1d (training-mode batch stats) (+ activation).
    # The Linear bias is omitted: it cancels exactly inside (h - mean).
    lhs = x_ref[...]
    if matmul_dtype is not None:
        lhs = lhs.astype(matmul_dtype)
    h = jnp.dot(lhs, w_ref[...], preferred_element_type=jnp.float32)
    mean = jnp.mean(h, axis=0, keepdims=True)
    c = h - mean
    var = jnp.mean(c * c, axis=0, keepdims=True)          # two-pass, biased
    h = c * (g_ref[...] * lax.rsqrt(var + BN_EPS)) + b_ref[...]
    o_ref[...] = _apply_activation(h, activation, valid_cols=valid_cols).astype(o_ref.dtype)


# ------------------------------ parameter prep --------------------------------

def init_encoder_params(key, n, m, dim):
    sizes = [n] + list(dim) + [m]
    params = []
    for i in range(len(sizes) - 1):
        din, dout = sizes[i], sizes[i + 1]
        key, kw, kb = jax.random.split(key, 3)
        bound = 1.0 / (din ** 0.5)                 # PyTorch Linear default init bound
        w = jax.random.uniform(kw, (din, dout), jnp.float32, -bound, bound)
        b = jax.random.uniform(kb, (dout,), jnp.float32, -bound, bound)
        gamma = jnp.ones((dout,), jnp.float32)     # BatchNorm1d defaults
        beta = jnp.zeros((dout,), jnp.float32)
        params.append((w, b, gamma, beta))
    return params


def prepare_encoder_params(raw_params, *, activation=None, norm=False,
                           matmul_dtype=None):
    """Pad + cast parameters ONCE (at init); reuse the plan for every forward.

    Feature (output) axes are padded to 128 multiples; weight rows of layer i>0
    are padded to match layer i-1's padded output width so activations can be
    carried at padded width between layers without per-layer pad/slice glue.
    """
    wdt = jnp.float32 if matmul_dtype is None else matmul_dtype
    layers = []
    n_layers = len(raw_params)
    for i, (w, b, gamma, beta) in enumerate(raw_params):
        din, dout = w.shape
        rows = din if i == 0 else _round_up(din, 128)
        doutp = _round_up(dout, 128)
        wp = jnp.pad(w.astype(wdt), ((0, rows - din), (0, doutp - dout)))
        act = activation if i < n_layers - 1 else None     # last block: act=None
        layer = {"w": wp, "dout": dout, "doutp": doutp, "activation": act}
        if norm:
            # gamma=1 / beta=0 pads keep BN finite on the all-zero padded cols.
            layer["gamma"] = jnp.pad(gamma.astype(jnp.float32), (0, doutp - dout),
                                     constant_values=1.0).reshape(1, doutp)
            layer["beta"] = jnp.pad(beta.astype(jnp.float32),
                                    (0, doutp - dout)).reshape(1, doutp)
        else:
            layer["bias"] = jnp.pad(b.astype(jnp.float32),
                                    (0, doutp - dout)).reshape(1, doutp)
        layers.append(layer)
    return {"layers": layers, "norm": norm, "matmul_dtype": matmul_dtype,
            "out_dim": raw_params[-1][0].shape[1]}


# ------------------------------- forward pass ---------------------------------

def _fused_vmem_estimate(n, plan):
    nbytes = lambda a: a.size * a.dtype.itemsize
    total, widest = 0, 0
    for lyr in plan["layers"]:
        total += nbytes(lyr["w"])
        for k in ("bias", "gamma", "beta"):
            if k in lyr:
                total += nbytes(lyr[k])
        widest = max(widest, lyr["doutp"], lyr["w"].shape[0])
    total += 5 * 4 * n * widest          # x, output, ~3 live f32 intermediates
    return total


def _layer_forward(h, lyr, *, norm, matmul_dtype):
    n, d1 = h.shape
    rows, doutp = lyr["w"].shape
    assert rows == d1, (rows, d1)
    act = lyr["activation"]
    if act == "softmax":
        tn = doutp                                   # full row needed in one tile
    else:
        tn = _pick_tn(doutp, cap=_TN_CAP, prefer_split=(_NUM_TC > 1))
    nj = doutp // tn
    vc = lyr["dout"] if act == "softmax" else None

    x_spec = pl.BlockSpec((n, d1), lambda j: (0, 0))     # resident, DMA'd once
    w_spec = pl.BlockSpec((d1, tn), lambda j: (0, j))
    vec_spec = pl.BlockSpec((1, tn), lambda j: (0, j))
    out_spec = pl.BlockSpec((n, tn), lambda j: (0, j))

    if norm:
        kernel = functools.partial(_layer_bn_kernel, activation=act,
                                   valid_cols=vc, matmul_dtype=matmul_dtype)
        operands = (h, lyr["w"], lyr["gamma"], lyr["beta"])
        in_specs = [x_spec, w_spec, vec_spec, vec_spec]
    else:
        kernel = functools.partial(_layer_bias_kernel, activation=act,
                                   valid_cols=vc, matmul_dtype=matmul_dtype)
        operands = (h, lyr["w"], lyr["bias"])
        in_specs = [x_spec, w_spec, vec_spec]

    wbytes = lyr["w"].size * lyr["w"].dtype.itemsize
    cost = pl.CostEstimate(
        flops=2 * n * d1 * doutp,
        transcendentals=(n * doutp) if act is not None else 0,
        bytes_accessed=4 * n * d1 + wbytes + 4 * n * doutp + 8 * doutp)

    # TODO(synk): very large d1 or very large batch would need a K-tiled
    # accumulator / batch-tiled BN-stats path; not needed at encoder MLP sizes.
    return pl.pallas_call(
        kernel,
        out_shape=jax.ShapeDtypeStruct((n, doutp), jnp.float32),
        grid_spec=pltpu.PrefetchScalarGridSpec(
            num_scalar_prefetch=0,
            grid=(nj,),
            in_specs=in_specs,
            out_specs=out_spec,
        ),
        compiler_params=pltpu.CompilerParams(
            dimension_semantics=("parallel",),
            vmem_limit_bytes=_VMEM_LIMIT,
        ),
        cost_estimate=cost,
    )(*operands)


def encoder_forward(plan, x, *, force_per_layer=False):
    """Pallas encoder.forward: chain of mlp_blocks; last block activation=None."""
    n = x.shape[0]
    layers = plan["layers"]
    norm = plan["norm"]
    mdt = plan["matmul_dtype"]
    out_dim = plan["out_dim"]

    fuse = (not force_per_layer) and \
        _fused_vmem_estimate(n, plan) <= _VMEM_LIMIT // 3

    if fuse:
        operands = [x]
        layer_meta = []
        flops = trans = 0
        bytes_acc = x.size * x.dtype.itemsize
        for lyr in layers:
            operands.append(lyr["w"])
            if norm:
                operands += [lyr["gamma"], lyr["beta"]]
                bytes_acc += 8 * lyr["doutp"]
            else:
                operands.append(lyr["bias"])
                bytes_acc += 4 * lyr["doutp"]
            layer_meta.append((lyr["activation"], lyr["dout"]))
            k, dp = lyr["w"].shape
            flops += 2 * n * k * dp
            if lyr["activation"] is not None:
                trans += n * dp
            bytes_acc += lyr["w"].size * lyr["w"].dtype.itemsize
        doutp_last = layers[-1]["doutp"]
        bytes_acc += 4 * n * doutp_last

        kernel = functools.partial(_fused_encoder_kernel,
                                   layer_meta=tuple(layer_meta),
                                   norm=norm, matmul_dtype=mdt)
        out = pl.pallas_call(
            kernel,
            out_shape=jax.ShapeDtypeStruct((n, doutp_last), jnp.float32),
            in_specs=[pl.BlockSpec(memory_space=pltpu.MemorySpace.VMEM)] * len(operands),
            out_specs=pl.BlockSpec(memory_space=pltpu.MemorySpace.VMEM),
            compiler_params=pltpu.CompilerParams(vmem_limit_bytes=_VMEM_LIMIT),
            cost_estimate=pl.CostEstimate(flops=flops, transcendentals=trans,
                                          bytes_accessed=bytes_acc),
        )(*operands)
        return out[:, :out_dim]

    # Per-layer fallback: x resident, feature-tiled, activations carried at
    # padded width; single slice at the end.
    h = x
    for lyr in layers:
        h = _layer_forward(h, lyr, norm=norm, matmul_dtype=mdt)
    return h[:, :out_dim]


# TODO(synk): Dropout with p>0 (training-mode random mask) and BatchNorm1d
# eval-mode running statistics are not implemented; forward matches the
# module's defaults (p=0.0, training batch stats).


# ------------------------------ pure-JAX reference ----------------------------

def encoder_reference(raw_params, x, *, activation=None, norm=False):
    h = x
    last = len(raw_params) - 1
    for i, (w, b, gamma, beta) in enumerate(raw_params):
        act = activation if i < last else None
        z = h @ w + b
        if norm:
            mean = jnp.mean(z, axis=0, keepdims=True)
            var = jnp.mean((z - mean) ** 2, axis=0, keepdims=True)
            z = (z - mean) / jnp.sqrt(var + BN_EPS) * gamma + beta
        if act == "gelu":
            z = jax.nn.gelu(z, approximate=False)
        elif act == "relu":
            z = jax.nn.relu(z)
        elif act is not None:
            raise ValueError(act)
        h = z
    return h


if __name__ == "__main__":
    batch, n_in, m_out = 16, 32, 8
    dims = [512, 64]                       # encoder default dim=[512, 64]

    key = jax.random.PRNGKey(0)
    key, kx = jax.random.split(key)
    x = jax.random.normal(kx, (batch, n_in), dtype=jnp.float32)
    raw = init_encoder_params(key, n_in, m_out, dims)

    # Config 1: module defaults (activation=None, norm=False) -> Linear chain.
    plan0 = prepare_encoder_params(raw, activation=None, norm=False)
    out0 = encoder_forward(plan0, x)
    jax.block_until_ready(out0)
    ref0 = encoder_reference(raw, x, activation=None, norm=False)
    assert out0.shape == (batch, m_out)
    assert jnp.allclose(out0, ref0, atol=2e-5, rtol=2e-5), \
        float(jnp.max(jnp.abs(out0 - ref0)))

    # Config 2: activation='gelu', norm=True (Linear -> BN(train) -> GELU -> Dropout(0)).
    plan1 = prepare_encoder_params(raw, activation="gelu", norm=True)
    out1 = encoder_forward(plan1, x)
    jax.block_until_ready(out1)
    ref1 = encoder_reference(raw, x, activation="gelu", norm=True)
    assert out1.shape == (batch, m_out)
    assert jnp.allclose(out1, ref1, atol=2e-5, rtol=2e-5), \
        float(jnp.max(jnp.abs(out1 - ref1)))

    # Config 3: exercise the per-layer (x-resident, feature-tiled) fallback path.
    out2 = encoder_forward(plan1, x, force_per_layer=True)
    jax.block_until_ready(out2)
    assert jnp.allclose(out2, ref1, atol=2e-5, rtol=2e-5), \
        float(jnp.max(jnp.abs(out2 - ref1)))

    print("KERNEL_OK")
</pallas_src>

<mosaic_0001>
module attributes {stable_mosaic.version = 11 : i64} {
  func.func @_fused_encoder_kernel(%arg0: memref<16x32xf32, #tpu.memory_space<vmem>>, %arg1: memref<32x512xf32, #tpu.memory_space<vmem>>, %arg2: memref<1x512xf32, #tpu.memory_space<vmem>>, %arg3: memref<512x128xf32, #tpu.memory_space<vmem>>, %arg4: memref<1x128xf32, #tpu.memory_space<vmem>>, %arg5: memref<128x128xf32, #tpu.memory_space<vmem>>, %arg6: memref<1x128xf32, #tpu.memory_space<vmem>>, %arg7: memref<16x128xf32, #tpu.memory_space<vmem>>) attributes {dimension_semantics = [], scalar_prefetch = 0 : i64, scratch_operands = 0 : i64, tpu.core_type = #tpu.core_type<tc>} {
    %c0 = arith.constant 0 : index
    %c0_0 = arith.constant 0 : index
    %0 = vector.load %arg0[%c0, %c0_0] : memref<16x32xf32, #tpu.memory_space<vmem>>, vector<16x32xf32>
    %c0_1 = arith.constant 0 : index
    %c0_2 = arith.constant 0 : index
    %1 = vector.load %arg1[%c0_1, %c0_2] : memref<32x512xf32, #tpu.memory_space<vmem>>, vector<32x512xf32>
    %cst = arith.constant dense<0.000000e+00> : vector<16x512xf32>
    %2 = tpu.matmul %0, %1, %cst {dimension_numbers = #tpu.dot_dimension_numbers<[1], [0], [0], [1], [0, 0, 1, 1], [], []>} : vector<16x32xf32>, vector<32x512xf32>, vector<16x512xf32> -> vector<16x512xf32>
    %c0_3 = arith.constant 0 : index
    %c0_4 = arith.constant 0 : index
    %3 = vector.load %arg2[%c0_3, %c0_4] : memref<1x512xf32, #tpu.memory_space<vmem>>, vector<1x512xf32>
    %4 = vector.broadcast %3 : vector<1x512xf32> to vector<16x512xf32>
    %5 = arith.addf %2, %4 : vector<16x512xf32>
    %c0_5 = arith.constant 0 : index
    %c0_6 = arith.constant 0 : index
    %6 = vector.load %arg3[%c0_5, %c0_6] : memref<512x128xf32, #tpu.memory_space<vmem>>, vector<512x128xf32>
    %cst_7 = arith.constant dense<0.000000e+00> : vector<16x128xf32>
    %7 = tpu.matmul %5, %6, %cst_7 {dimension_numbers = #tpu.dot_dimension_numbers<[1], [0], [0], [1], [0, 0, 1, 1], [], []>} : vector<16x512xf32>, vector<512x128xf32>, vector<16x128xf32> -> vector<16x128xf32>
    %c0_8 = arith.constant 0 : index
    %c0_9 = arith.constant 0 : index
    %8 = vector.load %arg4[%c0_8, %c0_9] : memref<1x128xf32, #tpu.memory_space<vmem>>, vector<1x128xf32>
    %9 = vector.broadcast %8 : vector<1x128xf32> to vector<16x128xf32>
    %10 = arith.addf %7, %9 : vector<16x128xf32>
    %c0_10 = arith.constant 0 : index
    %c0_11 = arith.constant 0 : index
    %11 = vector.load %arg5[%c0_10, %c0_11] : memref<128x128xf32, #tpu.memory_space<vmem>>, vector<128x128xf32>
    %cst_12 = arith.constant dense<0.000000e+00> : vector<16x128xf32>
    %12 = tpu.matmul %10, %11, %cst_12 {dimension_numbers = #tpu.dot_dimension_numbers<[1], [0], [0], [1], [0, 0, 1, 1], [], []>} : vector<16x128xf32>, vector<128x128xf32>, vector<16x128xf32> -> vector<16x128xf32>
    %c0_13 = arith.constant 0 : index
    %c0_14 = arith.constant 0 : index
    %13 = vector.load %arg6[%c0_13, %c0_14] : memref<1x128xf32, #tpu.memory_space<vmem>>, vector<1x128xf32>
    %14 = vector.broadcast %13 : vector<1x128xf32> to vector<16x128xf32>
    %15 = arith.addf %12, %14 : vector<16x128xf32>
    %c0_15 = arith.constant 0 : index
    %c0_16 = arith.constant 0 : index
    %16 = vector.load %arg7[%c0_15, %c0_16] : memref<16x128xf32, #tpu.memory_space<vmem>>, vector<16x128xf32>
    tpu.vector_store %arg7[%c0_15, %c0_16], %15 {strides = array<i32>} : memref<16x128xf32, #tpu.memory_space<vmem>>, vector<16x128xf32>,
    return
  }
}

</mosaic_0001>

<llo_original>
// kernel: tpu_custom_call.1
$region0: #{tpu_custom_call.1}
  #allocation0 [shape = 'u32[]', space=smem, size = 0x4, offset = 0x4, fixed_abs, tag = 'smem constant byte address 0x4 - core index']
  #allocation1 [shape = 'u32[144,128]{1,0:T(1,128)}', space=vmem, size = 0x12000, scoped, tag = 'internal scratch']
  %s0 = inlined_call_operand.hbm [shape: f32[16,32], index: 0, kind: input, shape index: {}]
  %s1 = inlined_call_operand.hbm [shape: f32[32,512], index: 1, kind: input, shape index: {}]
  %s2 = inlined_call_operand.vmem [shape: f32[1,512], index: 2, kind: input, shape index: {}]
  %s3 = inlined_call_operand.hbm [shape: f32[512,128], index: 3, kind: input, shape index: {}]
  %s4 = inlined_call_operand.vmem [shape: f32[1,128], index: 4, kind: input, shape index: {}]
  %s5 = inlined_call_operand.hbm [shape: f32[128,128], index: 5, kind: input, shape index: {}]
  %s6 = inlined_call_operand.vmem [shape: f32[1,128], index: 6, kind: input, shape index: {}]
  %s7 = inlined_call_operand.hbm [shape: f32[16,128], index: 7, kind: output, shape index: {}]
  %s8 = sld [smem:[#allocation0]]
  $region54: #{tpu_custom_call.1} parent=0
    _
  %s10 = ssub.s32 1, %s8
  %s11 = scalar_select 0, %s10, %s8
  $region1: #{tpu_custom_call.1} parent=0
    #allocation2 [shape = 'u8[8192]{0}', space=vmem, size = 0x2000, scoped, tag = 'input window, operand 0, single buffered']
    #allocation3 [shape = 's32[1]{0}', space=sflag, size = 0x4, scoped, tag = 'scoped memory for tpu_custom_call.1']
    #allocation4 [shape = 's32[1]{0}', space=sflag, size = 0x4, scoped, tag = 'scoped memory for tpu_custom_call.1']
    #allocation5 [shape = 'u8[65536]{0}', space=vmem, size = 0x10000, scoped, tag = 'input window, operand 1, single buffered']
    #allocation6 [shape = 's32[1]{0}', space=sflag, size = 0x4, scoped, tag = 'scoped memory for tpu_custom_call.1']
    #allocation7 [shape = 'u8[262144]{0}', space=vmem, size = 0x40000, scoped, tag = 'input window, operand 3, single buffered']
    #allocation8 [shape = 'u8[65536]{0}', space=vmem, size = 0x10000, scoped, tag = 'input window, operand 5, single buffered']
    #allocation9 [shape = 's32[1]{0}', space=sflag, size = 0x4, scoped, tag = 'scoped memory for tpu_custom_call.1']
    #allocation10 [shape = 'u8[8192]{0}', space=vmem, size = 0x2000, scoped, tag = 'output window, operand 0, single buffered']
    %12 = vsyncpa [#allocation3], 0
    %13 = vsyncpa [#allocation6], 0
    %14 = vsyncpa [#allocation9], 0
    %15 = vsyncpa [#allocation4], 0
    // Predicated region
    $region2: #{tpu_custom_call.1} parent=1 // pred_check
      _
    $region3: #{tpu_custom_call.1} parent=1 // pred_check_branch
      %17 = sbr.rel (0) target = $region5
    $region4: #{tpu_custom_call.1} parent=1 // pred_region
      %s19 = ssub.s32 256, 256
      %20 = vsyncadd [#allocation3], %s19
      %s21 = sshll.u32 [#allocation2], 4
      %s22 = int_to_ptr.vmem [resolvable:$true] %s21
      %27 = dma.hbm_to_vmem [thread:$0]  %s0, 256, %s22, [#allocation3], 128, 128, 8
    $region5: #{tpu_custom_call.1} parent=1 // pred_fallthru
      _
    // Predicated region
    $region6: #{tpu_custom_call.1} parent=1 // pred_check
      _
    $region7: #{tpu_custom_call.1} parent=1 // pred_check_branch
      %29 = sbr.rel (0) target = $region9
    $region8: #{tpu_custom_call.1} parent=1 // pred_region
      %s31 = ssub.s32 2048, 2048
      %32 = vsyncadd [#allocation6], %s31
      %s33 = sshll.u32 [#allocation5], 4
      %s34 = int_to_ptr.vmem [resolvable:$true] %s33
      %39 = dma.hbm_to_vmem [thread:$0]  %s1, 2048, %s34, [#allocation6], 512, 512, 32
    $region9: #{tpu_custom_call.1} parent=1 // pred_fallthru
      _
    // Predicated region
    $region10: #{tpu_custom_call.1} parent=1 // pred_check
      _
    $region11: #{tpu_custom_call.1} parent=1 // pred_check_branch
      %41 = sbr.rel (0) target = $region13
    $region12: #{tpu_custom_call.1} parent=1 // pred_region
      _
    $region13: #{tpu_custom_call.1} parent=1 // pred_fallthru
      _
    // Predicated region
    $region14: #{tpu_custom_call.1} parent=1 // pred_check
      _
    $region15: #{tpu_custom_call.1} parent=1 // pred_check_branch
      %43 = sbr.rel (0) target = $region17
    $region16: #{tpu_custom_call.1} parent=1 // pred_region
      %s45 = ssub.s32 8192, 8192
      %46 = vsyncadd [#allocation6], %s45
      %s47 = sshll.u32 [#allocation7], 4
      %s48 = int_to_ptr.vmem [resolvable:$true] %s47
      %53 = dma.hbm_to_vmem [thread:$0]  %s3, 8192, %s48, [#allocation6], 128, 128, 8
    $region17: #{tpu_custom_call.1} parent=1 // pred_fallthru
      _
    // Predicated region
    $region18: #{tpu_custom_call.1} parent=1 // pred_check
      _
    $region19: #{tpu_custom_call.1} parent=1 // pred_check_branch
      %55 = sbr.rel (0) target = $region21
    $region20: #{tpu_custom_call.1} parent=1 // pred_region
      _
    $region21: #{tpu_custom_call.1} parent=1 // pred_fallthru
      _
    // Predicated region
    $region22: #{tpu_custom_call.1} parent=1 // pred_check
      _
    $region23: #{tpu_custom_call.1} parent=1 // pred_check_branch
      %57 = sbr.rel (0) target = $region25
    $region24: #{tpu_custom_call.1} parent=1 // pred_region
      %s59 = ssub.s32 2048, 2048
      %60 = vsyncadd [#allocation9], %s59
      %s61 = sshll.u32 [#allocation8], 4
      %s62 = int_to_ptr.vmem [resolvable:$true] %s61
      %67 = dma.hbm_to_vmem [thread:$0]  %s5, 2048, %s62, [#allocation9], 128, 128, 8
    $region25: #{tpu_custom_call.1} parent=1 // pred_fallthru
      _
    // Predicated region
    $region26: #{tpu_custom_call.1} parent=1 // pred_check
      _
    $region27: #{tpu_custom_call.1} parent=1 // pred_check_branch
      %69 = sbr.rel (0) target = $region29
    $region28: #{tpu_custom_call.1} parent=1 // pred_region
      _
    $region29: #{tpu_custom_call.1} parent=1 // pred_fallthru
      _
    // Predicated region
    $region30: #{tpu_custom_call.1} parent=1 // pred_check
      _
    $region31: #{tpu_custom_call.1} parent=1 // pred_check_branch
      %71 = sbr.rel (0) target = $region33
    $region32: #{tpu_custom_call.1} parent=1 // pred_region
      %72 = dma.done [#allocation3], 256
    $region33: #{tpu_custom_call.1} parent=1 // pred_fallthru
      _
    // Predicated region
    $region34: #{tpu_custom_call.1} parent=1 // pred_check
      _
    $region35: #{tpu_custom_call.1} parent=1 // pred_check_branch
      %74 = sbr.rel (0) target = $region37
    $region36: #{tpu_custom_call.1} parent=1 // pred_region
      %75 = dma.done [#allocation6], 2048
    $region37: #{tpu_custom_call.1} parent=1 // pred_fallthru
      _
    // Predicated region
    $region38: #{tpu_custom_call.1} parent=1 // pred_check
      _
    $region39: #{tpu_custom_call.1} parent=1 // pred_check_branch
      %77 = sbr.rel (0) target = $region41
    $region40: #{tpu_custom_call.1} parent=1 // pred_region
      %78 = dma.done [#allocation6], 8192
    $region41: #{tpu_custom_call.1} parent=1 // pred_fallthru
      _
    // Predicated region
    $region42: #{tpu_custom_call.1} parent=1 // pred_check
      _
    $region43: #{tpu_custom_call.1} parent=1 // pred_check_branch
      %80 = sbr.rel (0) target = $region45
    $region44: #{tpu_custom_call.1} parent=1 // pred_region
      %81 = dma.done [#allocation9], 2048
    $region45: #{tpu_custom_call.1} parent=1 // pred_fallthru
      _
    %v82 = vld [vmem:[#allocation2] sm:$0xff]
    %v83 = vld [vmem:[#allocation2 + $0x8] sm:$0xff]
    %v84 = vld [vmem:[#allocation5] sm:$0xff]
    %v85 = vld [vmem:[#allocation5 + $0x8] sm:$0xff]
    %v86 = vld [vmem:[#allocation5 + $0x10] sm:$0xff]
    %v87 = vld [vmem:[#allocation5 + $0x18] sm:$0xff]
    %v88 = vld [vmem:[#allocation5 + $0x20] sm:$0xff]
    %v89 = vld [vmem:[#allocation5 + $0x28] sm:$0xff]
    %v90 = vld [vmem:[#allocation5 + $0x30] sm:$0xff]
    %v91 = vld [vmem:[#allocation5 + $0x38] sm:$0xff]
    %v92 = vld [vmem:[#allocation5 + $0x40] sm:$0xff]
    %v93 = vld [vmem:[#allocation5 + $0x48] sm:$0xff]
    %v94 = vld [vmem:[#allocation5 + $0x50] sm:$0xff]
    %v95 = vld [vmem:[#allocation5 + $0x58] sm:$0xff]
    %v96 = vld [vmem:[#allocation5 + $0x60] sm:$0xff]
    %v97 = vld [vmem:[#allocation5 + $0x68] sm:$0xff]
    %v98 = vld [vmem:[#allocation5 + $0x70] sm:$0xff]
    %v99 = vld [vmem:[#allocation5 + $0x78] sm:$0xff]
    %v100 = vld [vmem:[%s2] sm:$0xf]
    %v102 = vlaneseq
    %v103 = vshrl.u32 %v102, 7
    %v104 = vsub.s32 0, %v103
    %v105 = vrot.slane %v100, %v104
    %v106 = vlaneseq
    %v107 = vshrl.u32 %v106, 7
    %v108 = vsub.s32 1, %v107
    %v109 = vrot.slane %v100, %v108
    %v110 = vlaneseq
    %v111 = vshrl.u32 %v110, 7
    %v112 = vsub.s32 2, %v111
    %v113 = vrot.slane %v100, %v112
    %v114 = vlaneseq
    %v115 = vshrl.u32 %v114, 7
    %v116 = vsub.s32 3, %v115
    %v117 = vrot.slane %v100, %v116
    %vm122 = vcmask 261120
    %v124 = vsel %vm122, %v82, 0
    %v127 = vsel %vm122, %v83, 0
    %129 = vmatprep.subr.mxu0 %v85
    %130 = vmatpush1.msra.mxu0 %v84
    %131 = vmatprep.subr.mxu0 %v89
    %132 = vmatpush1.msra.mxu0 %v88
    %133 = vmatprep.subr.mxu0 %v93
    %134 = vmatpush1.msra.mxu0 %v92
    %135 = vmatprep.subr.mxu0 %v97
    %136 = vmatpush1.msra.mxu0 %v96
    %137 = vmatprep.subr.mxu0 0.0
    %138 = vmatpush1.msra.mxu0 0.0
    %139 = vmatprep.subr.mxu0 0.0
    %140 = vmatpush1.msra.mxu0 0.0
    %141 = vmatprep.subr.mxu0 0.0
    %142 = vmatpush1.msra.mxu0 0.0
    %143 = vmatprep.subr.mxu0 0.0
    %144 = vmatpush1.msra.mxu0 0.0
    %145 = vmatprep.subr.mxu0 0.0
    %146 = vmatpush1.msra.mxu0 0.0
    %147 = vmatprep.subr.mxu0 0.0
    %148 = vmatpush1.msra.mxu0 0.0
    %149 = vmatprep.subr.mxu0 0.0
    %150 = vmatpush1.msra.mxu0 0.0
    %151 = vmatprep.subr.mxu0 0.0
    %152 = vmatpush1.msra.mxu0 0.0
    %153 = vmatprep.subr.mxu0 0.0
    %154 = vmatpush1.msra.mxu0 0.0
    %155 = vmatprep.subr.mxu0 0.0
    %156 = vmatpush1.msra.mxu0 0.0
    %157 = vmatprep.subr.mxu0 0.0
    %158 = vmatpush1.msra.mxu0 0.0
    %159 = vmatprep.subr.mxu0 0.0
    %160 = vmatpush1.msra.mxu0 0.0
    %161 = vmatprep.subr.mxu0 0.0
    %162 = vmatpush1.msra.mxu0 0.0
    %163 = vmatprep.subr.mxu0 0.0
    %164 = vmatpush1.msra.mxu0 0.0
    %165 = vmatprep.subr.mxu0 0.0
    %166 = vmatpush1.msra.mxu0 0.0
    %167 = vmatprep.subr.mxu0 0.0
    %168 = vmatpush1.msra.mxu0 0.0
    %169 = vmatprep.subr.mxu0 0.0
    %170 = vmatpush1.msra.mxu0 0.0
    %171 = vmatprep.subr.mxu0 0.0
    %172 = vmatpush1.msra.mxu0 0.0
    %173 = vmatprep.subr.mxu0 0.0
    %174 = vmatpush1.msra.mxu0 0.0
    %175 = vmatprep.subr.mxu0 0.0
    %176 = vmatpush1.msra.mxu0 0.0
    %177 = vmatprep.subr.mxu0 0.0
    %178 = vmatpush1.msra.mxu0 0.0
    %179 = vmatprep.subr.mxu0 0.0
    %180 = vmatpush1.msra.mxu0 0.0
    %181 = vmatprep.subr.mxu0 0.0
    %182 = vmatpush1.msra.mxu0 0.0
    %183 = vmatprep.subr.mxu0 0.0
    %184 = vmatpush1.msra.mxu0 0.0
    %185 = vmatprep.subr.mxu0 0.0
    %186 = vmatpush1.msra.mxu0 0.0
    %187 = vmatprep.subr.mxu0 0.0
    %188 = vmatpush1.msra.mxu0 0.0
    %189 = vmatprep.subr.mxu0 0.0
    %190 = vmatpush1.msra.mxu0 0.0
    %191 = vmatprep.subr.mxu0 0.0
    %192 = vmatpush1.msra.mxu0 0.0
    %193 = vmatprep.mubr.f32.mxu0 0.0
    %194 = vmatmul.mubr.f32.gmra.mrb[0].mxu0 %v124
    %v195 = vpop.f32.mrb[0].mxu0
    %v196 = vadd.f32 %v105, %v195
    %v197 = vpop.f32.mrb[0].mxu0
    %v198 = vadd.f32 %v109, %v197
    %199 = vmatprep.mubr.f32.mxu0 0.0
    %200 = vmatmul.mubr.f32.gmra.mrb[0].mxu0 %v127
    %v201 = vpop.f32.mrb[0].mxu0
    %v202 = vadd.f32 %v105, %v201
    %v203 = vpop.f32.mrb[0].mxu0
    %v204 = vadd.f32 %v109, %v203
    %205 = vdwg.mxu0
    %206 = vmatprep.subr.mxu0 %v87
    %207 = vmatpush1.msra.mxu0 %v86
    %208 = vmatprep.subr.mxu0 %v91
    %209 = vmatpush1.msra.mxu0 %v90
    %210 = vmatprep.subr.mxu0 %v95
    %211 = vmatpush1.msra.mxu0 %v94
    %212 = vmatprep.subr.mxu0 %v99
    %213 = vmatpush1.msra.mxu0 %v98
    %214 = vmatprep.subr.mxu0 0.0
    %215 = vmatpush1.msra.mxu0 0.0
    %216 = vmatprep.subr.mxu0 0.0
    %217 = vmatpush1.msra.mxu0 0.0
    %218 = vmatprep.subr.mxu0 0.0
    %219 = vmatpush1.msra.mxu0 0.0
    %220 = vmatprep.subr.mxu0 0.0
    %221 = vmatpush1.msra.mxu0 0.0
    %222 = vmatprep.subr.mxu0 0.0
    %223 = vmatpush1.msra.mxu0 0.0
    %224 = vmatprep.subr.mxu0 0.0
    %225 = vmatpush1.msra.mxu0 0.0
    %226 = vmatprep.subr.mxu0 0.0
    %227 = vmatpush1.msra.mxu0 0.0
    %228 = vmatprep.subr.mxu0 0.0
    %229 = vmatpush1.msra.mxu0 0.0
    %230 = vmatprep.subr.mxu0 0.0
    %231 = vmatpush1.msra.mxu0 0.0
    %232 = vmatprep.subr.mxu0 0.0
    %233 = vmatpush1.msra.mxu0 0.0
    %234 = vmatprep.subr.mxu0 0.0
    %235 = vmatpush1.msra.mxu0 0.0
    %236 = vmatprep.subr.mxu0 0.0
    %237 = vmatpush1.msra.mxu0 0.0
    %238 = vmatprep.subr.mxu0 0.0
    %239 = vmatpush1.msra.mxu0 0.0
    %240 = vmatprep.subr.mxu0 0.0
    %241 = vmatpush1.msra.mxu0 0.0
    %242 = vmatprep.subr.mxu0 0.0
    %243 = vmatpush1.msra.mxu0 0.0
    %244 = vmatprep.subr.mxu0 0.0
    %245 = vmatpush1.msra.mxu0 0.0
    %246 = vmatprep.subr.mxu0 0.0
    %247 = vmatpush1.msra.mxu0 0.0
    %248 = vmatprep.subr.mxu0 0.0
    %249 = vmatpush1.msra.mxu0 0.0
    %250 = vmatprep.subr.mxu0 0.0
    %251 = vmatpush1.msra.mxu0 0.0
    %252 = vmatprep.subr.mxu0 0.0
    %253 = vmatpush1.msra.mxu0 0.0
    %254 = vmatprep.subr.mxu0 0.0
    %255 = vmatpush1.msra.mxu0 0.0
    %256 = vmatprep.subr.mxu0 0.0
    %257 = vmatpush1.msra.mxu0 0.0
    %258 = vmatprep.subr.mxu0 0.0
    %259 = vmatpush1.msra.mxu0 0.0
    %260 = vmatprep.subr.mxu0 0.0
    %261 = vmatpush1.msra.mxu0 0.0
    %262 = vmatprep.subr.mxu0 0.0
    %263 = vmatpush1.msra.mxu0 0.0
    %264 = vmatprep.subr.mxu0 0.0
    %265 = vmatpush1.msra.mxu0 0.0
    %266 = vmatprep.subr.mxu0 0.0
    %267 = vmatpush1.msra.mxu0 0.0
    %268 = vmatprep.subr.mxu0 0.0
    %269 = vmatpush1.msra.mxu0 0.0
    %270 = vmatprep.mubr.f32.mxu0 0.0
    %271 = vmatmul.mubr.f32.gmra.mrb[0].mxu0 %v124
    %v272 = vpop.f32.mrb[0].mxu0
    %v273 = vadd.f32 %v113, %v272
    %v274 = vpop.f32.mrb[0].mxu0
    %v275 = vadd.f32 %v117, %v274
    %276 = vmatprep.mubr.f32.mxu0 0.0
    %277 = vmatmul.mubr.f32.gmra.mrb[0].mxu0 %v127
    %v278 = vpop.f32.mrb[0].mxu0
    %v279 = vadd.f32 %v113, %v278
    %v280 = vpop.f32.mrb[0].mxu0
    %v281 = vadd.f32 %v117, %v280
    %282 = vdwg.mxu0
    %v283 = vld [vmem:[#allocation7] sm:$0xff]
    %v284 = vld [vmem:[#allocation7 + $0x8] sm:$0xff]
    %v285 = vld [vmem:[#allocation7 + $0x10] sm:$0xff]
    %v286 = vld [vmem:[#allocation7 + $0x18] sm:$0xff]
    %v287 = vld [vmem:[#allocation7 + $0x20] sm:$0xff]
    %v288 = vld [vmem:[#allocation7 + $0x28] sm:$0xff]
    %v289 = vld [vmem:[#allocation7 + $0x30] sm:$0xff]
    %v290 = vld [vmem:[#allocation7 + $0x38] sm:$0xff]
    %v291 = vld [vmem:[#allocation7 + $0x40] sm:$0xff]
    %v292 = vld [vmem:[#allocation7 + $0x48] sm:$0xff]
    %v293 = vld [vmem:[#allocation7 + $0x50] sm:$0xff]
    %v294 = vld [vmem:[#allocation7 + $0x58] sm:$0xff]
    %v295 = vld [vmem:[#allocation7 + $0x60] sm:$0xff]
    %v296 = vld [vmem:[#allocation7 + $0x68] sm:$0xff]
    %v297 = vld [vmem:[#allocation7 + $0x70] sm:$0xff]
    %v298 = vld [vmem:[#allocation7 + $0x78] sm:$0xff]
    %v299 = vld [vmem:[#allocation7 + $0x80] sm:$0xff]
    %v300 = vld [vmem:[#allocation7 + $0x88] sm:$0xff]
    %v301 = vld [vmem:[#allocation7 + $0x90] sm:$0xff]
    %v302 = vld [vmem:[#allocation7 + $0x98] sm:$0xff]
    %v303 = vld [vmem:[#allocation7 + $0xa0] sm:$0xff]
    %v304 = vld [vmem:[#allocation7 + $0xa8] sm:$0xff]
    %v305 = vld [vmem:[#allocation7 + $0xb0] sm:$0xff]
    %v306 = vld [vmem:[#allocation7 + $0xb8] sm:$0xff]
    %v307 = vld [vmem:[#allocation7 + $0xc0] sm:$0xff]
    %v308 = vld [vmem:[#allocation7 + $0xc8] sm:$0xff]
    %v309 = vld [vmem:[#allocation7 + $0xd0] sm:$0xff]
    %v310 = vld [vmem:[#allocation7 + $0xd8] sm:$0xff]
    %v311 = vld [vmem:[#allocation7 + $0xe0] sm:$0xff]
    %v312 = vld [vmem:[#allocation7 + $0xe8] sm:$0xff]
    %v313 = vld [vmem:[#allocation7 + $0xf0] sm:$0xff]
    %v314 = vld [vmem:[#allocation7 + $0xf8] sm:$0xff]
    %v315 = vld [vmem:[#allocation7 + $0x100] sm:$0xff]
    %v316 = vld [vmem:[#allocation7 + $0x108] sm:$0xff]
    %v317 = vld [vmem:[#allocation7 + $0x110] sm:$0xff]
    %v318 = vld [vmem:[#allocation7 + $0x118] sm:$0xff]
    %v319 = vld [vmem:[#allocation7 + $0x120] sm:$0xff]
    %v320 = vld [vmem:[#allocation7 + $0x128] sm:$0xff]
    %v321 = vld [vmem:[#allocation7 + $0x130] sm:$0xff]
    %v322 = vld [vmem:[#allocation7 + $0x138] sm:$0xff]
    %v323 = vld [vmem:[#allocation7 + $0x140] sm:$0xff]
    %v324 = vld [vmem:[#allocation7 + $0x148] sm:$0xff]
    %v325 = vld [vmem:[#allocation7 + $0x150] sm:$0xff]
    %v326 = vld [vmem:[#allocation7 + $0x158] sm:$0xff]
    %v327 = vld [vmem:[#allocation7 + $0x160] sm:$0xff]
    %v328 = vld [vmem:[#allocation7 + $0x168] sm:$0xff]
    %v329 = vld [vmem:[#allocation7 + $0x170] sm:$0xff]
    %v330 = vld [vmem:[#allocation7 + $0x178] sm:$0xff]
    %v331 = vld [vmem:[#allocation7 + $0x180] sm:$0xff]
    %v332 = vld [vmem:[#allocation7 + $0x188] sm:$0xff]
    %v333 = vld [vmem:[#allocation7 + $0x190] sm:$0xff]
    %v334 = vld [vmem:[#allocation7 + $0x198] sm:$0xff]
    %v335 = vld [vmem:[#allocation7 + $0x1a0] sm:$0xff]
    %v336 = vld [vmem:[#allocation7 + $0x1a8] sm:$0xff]
    %v337 = vld [vmem:[#allocation7 + $0x1b0] sm:$0xff]
    %v338 = vld [vmem:[#allocation7 + $0x1b8] sm:$0xff]
    %v339 = vld [vmem:[#allocation7 + $0x1c0] sm:$0xff]
    %v340 = vld [vmem:[#allocation7 + $0x1c8] sm:$0xff]
    %v341 = vld [vmem:[#allocation7 + $0x1d0] sm:$0xff]
    %v342 = vld [vmem:[#allocation7 + $0x1d8] sm:$0xff]
    %v343 = vld [vmem:[#allocation7 + $0x1e0] sm:$0xff]
    %v344 = vld [vmem:[#allocation7 + $0x1e8] sm:$0xff]
    %v345 = vld [vmem:[#allocation7 + $0x1f0] sm:$0xff]
    %v346 = vld [vmem:[#allocation7 + $0x1f8] sm:$0xff]
    %v347 = vld [vmem:[%s4] sm:$0x1]
    %v349 = vlaneseq
    %v350 = vshrl.u32 %v349, 7
    %v351 = vsub.s32 0, %v350
    %v352 = vrot.slane %v347, %v351
    %354 = vmatprep.subr.mxu0 0.0
    %355 = vmatpush1.msra.mxu0 %v283
    %356 = vmatprep.subr.mxu0 0.0
    %357 = vmatpush1.msra.mxu0 %v284
    %358 = vmatprep.subr.mxu0 0.0
    %359 = vmatpush1.msra.mxu0 %v285
    %360 = vmatprep.subr.mxu0 0.0
    %361 = vmatpush1.msra.mxu0 %v286
    %362 = vmatprep.subr.mxu0 0.0
    %363 = vmatpush1.msra.mxu0 %v287
    %364 = vmatprep.subr.mxu0 0.0
    %365 = vmatpush1.msra.mxu0 %v288
    %366 = vmatprep.subr.mxu0 0.0
    %367 = vmatpush1.msra.mxu0 %v289
    %368 = vmatprep.subr.mxu0 0.0
    %369 = vmatpush1.msra.mxu0 %v290
    %370 = vmatprep.subr.mxu0 0.0
    %371 = vmatpush1.msra.mxu0 %v291
    %372 = vmatprep.subr.mxu0 0.0
    %373 = vmatpush1.msra.mxu0 %v292
    %374 = vmatprep.subr.mxu0 0.0
    %375 = vmatpush1.msra.mxu0 %v293
    %376 = vmatprep.subr.mxu0 0.0
    %377 = vmatpush1.msra.mxu0 %v294
    %378 = vmatprep.subr.mxu0 0.0
    %379 = vmatpush1.msra.mxu0 %v295
    %380 = vmatprep.subr.mxu0 0.0
    %381 = vmatpush1.msra.mxu0 %v296
    %382 = vmatprep.subr.mxu0 0.0
    %383 = vmatpush1.msra.mxu0 %v297
    %384 = vmatprep.subr.mxu0 0.0
    %385 = vmatpush1.msra.mxu0 %v298
    %386 = vmatprep.subr.mxu0 0.0
    %387 = vmatpush1.msra.mxu0 %v299
    %388 = vmatprep.subr.mxu0 0.0
    %389 = vmatpush1.msra.mxu0 %v300
    %390 = vmatprep.subr.mxu0 0.0
    %391 = vmatpush1.msra.mxu0 %v301
    %392 = vmatprep.subr.mxu0 0.0
    %393 = vmatpush1.msra.mxu0 %v302
    %394 = vmatprep.subr.mxu0 0.0
    %395 = vmatpush1.msra.mxu0 %v303
    %396 = vmatprep.subr.mxu0 0.0
    %397 = vmatpush1.msra.mxu0 %v304
    %398 = vmatprep.subr.mxu0 0.0
    %399 = vmatpush1.msra.mxu0 %v305
    %400 = vmatprep.subr.mxu0 0.0
    %401 = vmatpush1.msra.mxu0 %v306
    %402 = vmatprep.subr.mxu0 0.0
    %403 = vmatpush1.msra.mxu0 %v307
    %404 = vmatprep.subr.mxu0 0.0
    %405 = vmatpush1.msra.mxu0 %v308
    %406 = vmatprep.subr.mxu0 0.0
    %407 = vmatpush1.msra.mxu0 %v309
    %408 = vmatprep.subr.mxu0 0.0
    %409 = vmatpush1.msra.mxu0 %v310
    %410 = vmatprep.subr.mxu0 0.0
    %411 = vmatpush1.msra.mxu0 %v311
    %412 = vmatprep.subr.mxu0 0.0
    %413 = vmatpush1.msra.mxu0 %v312
    %414 = vmatprep.subr.mxu0 0.0
    %415 = vmatpush1.msra.mxu0 %v313
    %416 = vmatprep.subr.mxu0 0.0
    %417 = vmatpush1.msra.mxu0 %v314
    %418 = vmatprep.mubr.f32.mxu0 %v198
    %419 = vmatmul.mubr.f32.gmra.mrb[0].mxu0 %v196
    %v420 = vpop.f32.mrb[0].mxu0
    %v421 = vadd.f32 %v352, %v420
    %v422 = vpop.f32.mrb[0].mxu0
    %423 = vmatprep.mubr.f32.mxu0 %v204
    %424 = vmatmul.mubr.f32.gmra.mrb[0].mxu0 %v202
    %v425 = vpop.f32.mrb[0].mxu0
    %v426 = vadd.f32 %v352, %v425
    %v427 = vpop.f32.mrb[0].mxu0
    %428 = vdwg.mxu0
    %429 = vmatprep.subr.mxu0 0.0
    %430 = vmatpush1.msra.mxu0 %v315
    %431 = vmatprep.subr.mxu0 0.0
    %432 = vmatpush1.msra.mxu0 %v316
    %433 = vmatprep.subr.mxu0 0.0
    %434 = vmatpush1.msra.mxu0 %v317
    %435 = vmatprep.subr.mxu0 0.0
    %436 = vmatpush1.msra.mxu0 %v318
    %437 = vmatprep.subr.mxu0 0.0
    %438 = vmatpush1.msra.mxu0 %v319
    %439 = vmatprep.subr.mxu0 0.0
    %440 = vmatpush1.msra.mxu0 %v320
    %441 = vmatprep.subr.mxu0 0.0
    %442 = vmatpush1.msra.mxu0 %v321
    %443 = vmatprep.subr.mxu0 0.0
    %444 = vmatpush1.msra.mxu0 %v322
    %445 = vmatprep.subr.mxu0 0.0
    %446 = vmatpush1.msra.mxu0 %v323
    %447 = vmatprep.subr.mxu0 0.0
    %448 = vmatpush1.msra.mxu0 %v324
    %449 = vmatprep.subr.mxu0 0.0
    %450 = vmatpush1.msra.mxu0 %v325
    %451 = vmatprep.subr.mxu0 0.0
    %452 = vmatpush1.msra.mxu0 %v326
    %453 = vmatprep.subr.mxu0 0.0
    %454 = vmatpush1.msra.mxu0 %v327
    %455 = vmatprep.subr.mxu0 0.0
    %456 = vmatpush1.msra.mxu0 %v328
    %457 = vmatprep.subr.mxu0 0.0
    %458 = vmatpush1.msra.mxu0 %v329
    %459 = vmatprep.subr.mxu0 0.0
    %460 = vmatpush1.msra.mxu0 %v330
    %461 = vmatprep.subr.mxu0 0.0
    %462 = vmatpush1.msra.mxu0 %v331
    %463 = vmatprep.subr.mxu0 0.0
    %464 = vmatpush1.msra.mxu0 %v332
    %465 = vmatprep.subr.mxu0 0.0
    %466 = vmatpush1.msra.mxu0 %v333
    %467 = vmatprep.subr.mxu0 0.0
    %468 = vmatpush1.msra.mxu0 %v334
    %469 = vmatprep.subr.mxu0 0.0
    %470 = vmatpush1.msra.mxu0 %v335
    %471 = vmatprep.subr.mxu0 0.0
    %472 = vmatpush1.msra.mxu0 %v336
    %473 = vmatprep.subr.mxu0 0.0
    %474 = vmatpush1.msra.mxu0 %v337
    %475 = vmatprep.subr.mxu0 0.0
    %476 = vmatpush1.msra.mxu0 %v338
    %477 = vmatprep.subr.mxu0 0.0
    %478 = vmatpush1.msra.mxu0 %v339
    %479 = vmatprep.subr.mxu0 0.0
    %480 = vmatpush1.msra.mxu0 %v340
    %481 = vmatprep.subr.mxu0 0.0
    %482 = vmatpush1.msra.mxu0 %v341
    %483 = vmatprep.subr.mxu0 0.0
    %484 = vmatpush1.msra.mxu0 %v342
    %485 = vmatprep.subr.mxu0 0.0
    %486 = vmatpush1.msra.mxu0 %v343
    %487 = vmatprep.subr.mxu0 0.0
    %488 = vmatpush1.msra.mxu0 %v344
    %489 = vmatprep.subr.mxu0 0.0
    %490 = vmatpush1.msra.mxu0 %v345
    %491 = vmatprep.subr.mxu0 0.0
    %492 = vmatpush1.msra.mxu0 %v346
    %493 = vmatprep.mubr.f32.mxu0 %v275
    %494 = vmatmul.mubr.f32.gmra.mrb[0].mxu0 %v273
    %v495 = vpop.f32.mrb[0].mxu0
    %v496 = vadd.f32 %v421, %v495
    %v497 = vpop.f32.mrb[0].mxu0
    %498 = vmatprep.mubr.f32.mxu0 %v281
    %499 = vmatmul.mubr.f32.gmra.mrb[0].mxu0 %v279
    %v500 = vpop.f32.mrb[0].mxu0
    %v501 = vadd.f32 %v426, %v500
    %v502 = vpop.f32.mrb[0].mxu0
    %503 = vdwg.mxu0
    %v504 = vld [vmem:[#allocation8] sm:$0xff]
    %v505 = vld [vmem:[#allocation8 + $0x8] sm:$0xff]
    %v506 = vld [vmem:[#allocation8 + $0x10] sm:$0xff]
    %v507 = vld [vmem:[#allocation8 + $0x18] sm:$0xff]
    %v508 = vld [vmem:[#allocation8 + $0x20] sm:$0xff]
    %v509 = vld [vmem:[#allocation8 + $0x28] sm:$0xff]
    %v510 = vld [vmem:[#allocation8 + $0x30] sm:$0xff]
    %v511 = vld [vmem:[#allocation8 + $0x38] sm:$0xff]
    %v512 = vld [vmem:[#allocation8 + $0x40] sm:$0xff]
    %v513 = vld [vmem:[#allocation8 + $0x48] sm:$0xff]
    %v514 = vld [vmem:[#allocation8 + $0x50] sm:$0xff]
    %v515 = vld [vmem:[#allocation8 + $0x58] sm:$0xff]
    %v516 = vld [vmem:[#allocation8 + $0x60] sm:$0xff]
    %v517 = vld [vmem:[#allocation8 + $0x68] sm:$0xff]
    %v518 = vld [vmem:[#allocation8 + $0x70] sm:$0xff]
    %v519 = vld [vmem:[#allocation8 + $0x78] sm:$0xff]
    %v520 = vld [vmem:[%s6] sm:$0x1]
    %v522 = vlaneseq
    %v523 = vshrl.u32 %v522, 7
    %v524 = vsub.s32 0, %v523
    %v525 = vrot.slane %v520, %v524
    %527 = vmatprep.subr.mxu0 0.0
    %528 = vmatpush1.msra.mxu0 %v504
    %529 = vmatprep.subr.mxu0 0.0
    %530 = vmatpush1.msra.mxu0 %v505
    %531 = vmatprep.subr.mxu0 0.0
    %532 = vmatpush1.msra.mxu0 %v506
    %533 = vmatprep.subr.mxu0 0.0
    %534 = vmatpush1.msra.mxu0 %v507
    %535 = vmatprep.subr.mxu0 0.0
    %536 = vmatpush1.msra.mxu0 %v508
    %537 = vmatprep.subr.mxu0 0.0
    %538 = vmatpush1.msra.mxu0 %v509
    %539 = vmatprep.subr.mxu0 0.0
    %540 = vmatpush1.msra.mxu0 %v510
    %541 = vmatprep.subr.mxu0 0.0
    %542 = vmatpush1.msra.mxu0 %v511
    %543 = vmatprep.subr.mxu0 0.0
    %544 = vmatpush1.msra.mxu0 %v512
    %545 = vmatprep.subr.mxu0 0.0
    %546 = vmatpush1.msra.mxu0 %v513
    %547 = vmatprep.subr.mxu0 0.0
    %548 = vmatpush1.msra.mxu0 %v514
    %549 = vmatprep.subr.mxu0 0.0
    %550 = vmatpush1.msra.mxu0 %v515
    %551 = vmatprep.subr.mxu0 0.0
    %552 = vmatpush1.msra.mxu0 %v516
    %553 = vmatprep.subr.mxu0 0.0
    %554 = vmatpush1.msra.mxu0 %v517
    %555 = vmatprep.subr.mxu0 0.0
    %556 = vmatpush1.msra.mxu0 %v518
    %557 = vmatprep.subr.mxu0 0.0
    %558 = vmatpush1.msra.mxu0 %v519
    %559 = vmatprep.subr.mxu0 0.0
    %560 = vmatpush1.msra.mxu0 0.0
    %561 = vmatprep.subr.mxu0 0.0
    %562 = vmatpush1.msra.mxu0 0.0
    %563 = vmatprep.subr.mxu0 0.0
    %564 = vmatpush1.msra.mxu0 0.0
    %565 = vmatprep.subr.mxu0 0.0
    %566 = vmatpush1.msra.mxu0 0.0
    %567 = vmatprep.subr.mxu0 0.0
    %568 = vmatpush1.msra.mxu0 0.0
    %569 = vmatprep.subr.mxu0 0.0
    %570 = vmatpush1.msra.mxu0 0.0
    %571 = vmatprep.subr.mxu0 0.0
    %572 = vmatpush1.msra.mxu0 0.0
    %573 = vmatprep.subr.mxu0 0.0
    %574 = vmatpush1.msra.mxu0 0.0
    %575 = vmatprep.subr.mxu0 0.0
    %576 = vmatpush1.msra.mxu0 0.0
    %577 = vmatprep.subr.mxu0 0.0
    %578 = vmatpush1.msra.mxu0 0.0
    %579 = vmatprep.subr.mxu0 0.0
    %580 = vmatpush1.msra.mxu0 0.0
    %581 = vmatprep.subr.mxu0 0.0
    %582 = vmatpush1.msra.mxu0 0.0
    %583 = vmatprep.subr.mxu0 0.0
    %584 = vmatpush1.msra.mxu0 0.0
    %585 = vmatprep.subr.mxu0 0.0
    %586 = vmatpush1.msra.mxu0 0.0
    %587 = vmatprep.subr.mxu0 0.0
    %588 = vmatpush1.msra.mxu0 0.0
    %589 = vmatprep.subr.mxu0 0.0
    %590 = vmatpush1.msra.mxu0 0.0
    %591 = vmatprep.mubr.f32.mxu0 0.0
    %592 = vmatmul.mubr.f32.gmra.mrb[0].mxu0 %v496
    %v593 = vpop.f32.mrb[0].mxu0
    %v594 = vadd.f32 %v525, %v593
    %v595 = vpop.f32.mrb[0].mxu0
    %596 = vmatprep.mubr.f32.mxu0 0.0
    %597 = vmatmul.mubr.f32.gmra.mrb[0].mxu0 %v501
    %v598 = vpop.f32.mrb[0].mxu0
    %v599 = vadd.f32 %v525, %v598
    %v600 = vpop.f32.mrb[0].mxu0
    %601 = vdwg.mxu0
    %602 = vst [vmem:[#allocation10] sm:$0xff] %v594
    %603 = vst [vmem:[#allocation10 + $0x8] sm:$0xff] %v599
    // Predicated region
    $region46: #{tpu_custom_call.1} parent=1 // pred_check
      _
    $region47: #{tpu_custom_call.1} parent=1 // pred_check_branch
      %605 = sbr.rel (0) target = $region49
    $region48: #{tpu_custom_call.1} parent=1 // pred_region
      %s607 = ssub.s32 256, 256
      %608 = vsyncadd [#allocation4], %s607
      %s609 = sshll.u32 [#allocation10], 4
      %s610 = int_to_ptr.vmem [resolvable:$true] %s609
      %615 = dma.vmem_to_hbm [thread:$0]  %s610, 256, %s7, [#allocation4], 128, 128, 8
    $region49: #{tpu_custom_call.1} parent=1 // pred_fallthru
      _
    // Predicated region
    $region50: #{tpu_custom_call.1} parent=1 // pred_check
      _
    $region51: #{tpu_custom_call.1} parent=1 // pred_check_branch
      %617 = sbr.rel (0) target = $region53
    $region52: #{tpu_custom_call.1} parent=1 // pred_region
      %618 = dma.done [#allocation4], 256
    $region53: #{tpu_custom_call.1} parent=1 // pred_fallthru
      _
    %619 = vsyncpa [#allocation3], 1
    %620 = vsyncpa [#allocation6], 1
    %621 = vsyncpa [#allocation9], 1
    %622 = vsyncpa [#allocation4], 1

</llo_original>
